<compile_context>
chip_gen: v7x
topology: tpu7x:2x2x1
jax: 0.10.0
libtpu: 0.0.40
codegen_flags: <defaults>
</compile_context>

<pallas_src>
import functools
import math

import jax
import jax.numpy as jnp
from jax import lax
from jax.experimental import pallas as pl
from jax.experimental.pallas import tpu as pltpu


def _leaky_relu(x, slope=0.01):
    # nn.LeakyReLU() default negative_slope = 0.01
    return jnp.where(x >= 0, x, slope * x)


def _round_up(x, m):
    return ((x + m - 1) // m) * m


def self_attention_kernel(sc_ref, st_ref, mct_ref, mt_ref, w1t_ref, w2t_ref,
                          o_ref, *, lc, lt, d_model, reverse):
    """One tbn-sized slab of batch*n_blocks rows.

    sc_ref : (tbn*lc, D)  seq_cur rows            (matmul dtype)
    st_ref : (tbn*lt, D)  seq_total rows          (matmul dtype)
    mct_ref: (lc, tbn)    mask_cur, transposed    (f32)
    mt_ref : (tbn, lt)    mask_total              (f32)
    w1t_ref, w2t_ref: (D, D)  weights, pre-transposed to (in, out)
    o_ref  : (lc, tbn)    softmax(attn), transposed (f32)
    """
    tbn = mt_ref.shape[0]
    d = sc_ref.shape[-1]

    # Projections + LeakyReLU: one MXU matmul each, f32 accumulation.
    k = _leaky_relu(jnp.dot(sc_ref[...], w1t_ref[...],
                            preferred_element_type=jnp.float32))      # (tbn*lc, D)
    v = _leaky_relu(jnp.dot(st_ref[...], w2t_ref[...],
                            preferred_element_type=jnp.float32))      # (tbn*lt, D)

    # masked_fill(attn, mask_total==0, 0).sum(-1) is linear in v, so reduce v
    # first: vbar[b,:] = sum_t mask_total[b,t] * v[b,t,:].
    mt = mt_ref[...]                                                   # (tbn, lt)
    vbar = jnp.sum(v.reshape(tbn, lt, d) * mt[:, :, None], axis=1)     # (tbn, D)

    # attn[b,i] = (k[b,i,:] . vbar[b,:]) / sqrt(d_model)
    attn = jnp.sum(k.reshape(tbn, lc, d) * vbar[:, None, :], axis=-1)  # (tbn, lc)
    attn = attn * (1.0 / math.sqrt(d_model))
    if reverse:
        attn = -attn

    # Lane-dense epilogue: transpose the small (tbn, lc) tile so the mask_cur
    # load, the softmax reductions (sublane axis) and the output store are all
    # full-lane / unmasked.
    attn_t = jnp.transpose(attn)                                       # (lc, tbn)
    attn_t = jnp.where(mct_ref[...] == 0.0, -1.0e9, attn_t)
    m = jnp.max(attn_t, axis=0, keepdims=True)
    e = jnp.exp(attn_t - m)
    o_ref[...] = e / jnp.sum(e, axis=0, keepdims=True)                 # exact softmax


def _choose_tile_bn(bn, lc, lt, d, in_itemsize):
    # Bytes moved per bn row per grid step (both sequences + both masks + out).
    per_bn = (lc + lt) * d * in_itemsize + (lc + lt + lc) * 4
    if bn <= 128:
        # Single grid step; every block equals the full (padded) array, so the
        # 128-lane constraint on the transposed output tile does not apply.
        return _round_up(max(bn, 8), 8)
    # Multi-step: the (lc, tbn) output/mask_cur tiles need tbn % 128 == 0 for
    # lane-dense stores.  Target ~2 MiB of traffic per step (amortizes the
    # ~0.35us/step pipeline overhead) and cap the double-buffered footprint so
    # it stays well inside v7x's 64 MiB VMEM per TensorCore.
    target = (2 * 1024 * 1024) // per_bn
    cap = (12 * 1024 * 1024) // per_bn           # 2x buffers -> ~24 MiB pipelined
    tbn = max(128, (min(target, cap) // 128) * 128)
    # Keep at least 2 grid steps so both v7x TensorCores get work.
    while tbn > 128 and _round_up(bn, tbn) // tbn < 2:
        tbn -= 128
    return tbn


def self_attention(seq_cur, seq_total, mask_cur, mask_total, w1, w2,
                   reverse=False, matmul_dtype=jnp.float32):
    """Forward pass of SelfAttention.  matmul_dtype=jnp.bfloat16 halves sc/st
    HBM traffic on v6e/v7x (f32 accumulation and the mask/-1e9/softmax epilogue
    are unchanged); default f32 keeps the numerical check tight."""
    B, N, Lc, D = seq_cur.shape
    Lt = seq_total.shape[2]
    BN = B * N

    in_itemsize = jnp.dtype(matmul_dtype).itemsize
    tbn = _choose_tile_bn(BN, Lc, Lt, D, in_itemsize)
    bn_pad = _round_up(BN, tbn)
    pad = bn_pad - BN
    grid = (bn_pad // tbn,)

    # Wrapper-side layout plumbing (free): flatten (BN, L, D) -> (BN*L, D),
    # transpose mask_cur to the lane-dense (Lc, bn) layout, pre-transpose the
    # weights to (in, out).  No feature-dim padding.
    sc2 = jnp.pad(seq_cur.reshape(BN, Lc, D), ((0, pad), (0, 0), (0, 0)))
    sc2 = sc2.reshape(bn_pad * Lc, D).astype(matmul_dtype)
    st2 = jnp.pad(seq_total.reshape(BN, Lt, D), ((0, pad), (0, 0), (0, 0)))
    st2 = st2.reshape(bn_pad * Lt, D).astype(matmul_dtype)
    mct = jnp.pad(mask_cur.reshape(BN, Lc).astype(jnp.float32),
                  ((0, pad), (0, 0))).T                                # (Lc, bn_pad)
    mt2 = jnp.pad(mask_total.reshape(BN, Lt).astype(jnp.float32),
                  ((0, pad), (0, 0)))                                  # (bn_pad, Lt)
    w1t = w1.T.astype(matmul_dtype)
    w2t = w2.T.astype(matmul_dtype)

    # Explicit VMEM budget (double-buffered inputs + output + weights + slack),
    # clamped to stay legal on v7x (64 MiB/TC) while allowing big tiles on
    # v5e/v6e (128 MiB).
    per_bn = (Lc + Lt) * D * in_itemsize + (Lc + Lt + Lc) * 4
    vmem_need = 2 * tbn * per_bn + 2 * D * D * in_itemsize + (2 << 20)
    vmem_limit = int(min(max(vmem_need, 32 * 1024 * 1024), 64 * 1024 * 1024))

    kernel = functools.partial(self_attention_kernel, lc=Lc, lt=Lt, d_model=D,
                               reverse=reverse)

    out_t = pl.pallas_call(
        kernel,
        out_shape=jax.ShapeDtypeStruct((Lc, bn_pad), jnp.float32),
        grid_spec=pltpu.PrefetchScalarGridSpec(
            num_scalar_prefetch=0,
            grid=grid,
            in_specs=[
                pl.BlockSpec((tbn * Lc, D), lambda i: (i, 0)),
                pl.BlockSpec((tbn * Lt, D), lambda i: (i, 0)),
                pl.BlockSpec((Lc, tbn), lambda i: (0, i)),
                pl.BlockSpec((tbn, Lt), lambda i: (i, 0)),
                pl.BlockSpec((D, D), lambda i: (0, 0)),
                pl.BlockSpec((D, D), lambda i: (0, 0)),
            ],
            out_specs=pl.BlockSpec((Lc, tbn), lambda i: (0, i)),
        ),
        compiler_params=pltpu.CompilerParams(
            dimension_semantics=("parallel",),
            vmem_limit_bytes=vmem_limit),
    )(sc2, st2, mct, mt2, w1t, w2t)

    return jnp.transpose(out_t)[:BN].reshape(B, N, Lc)


def self_attention_ref(seq_cur, seq_total, mask_cur, mask_total, w1, w2, reverse=False):
    """Pure-JAX reference mirroring the PyTorch forward.  Matmuls use HIGHEST
    precision so the f32 reference is accurate on TPU (the XLA DEFAULT
    precision truncates f32 matmuls to bf16, which is what broke the previous
    comparison)."""
    B, N, Lc, D = seq_cur.shape
    Lt = seq_total.shape[2]
    hp = lax.Precision.HIGHEST

    def lrelu(x):
        return jnp.where(x >= 0, x, 0.01 * x)

    k = lrelu(jnp.einsum("bnld,od->bnlo", seq_cur, w1, precision=hp)).reshape(B * N, Lc, D)
    v = lrelu(jnp.einsum("bnld,od->bnlo", seq_total, w2, precision=hp)).reshape(B * N, Lt, D)
    attn = jnp.einsum("bld,btd->blt", k, v, precision=hp) / math.sqrt(D)   # (BN, Lc, Lt)
    mt = mask_total.reshape(B * N, 1, Lt)
    attn = jnp.where(mt == 0, 0.0, attn)
    attn_cur = jnp.sum(attn, -1)                                           # (BN, Lc)
    if reverse:
        attn_cur = -attn_cur
    mc = mask_cur.reshape(B * N, Lc)
    attn_cur = jnp.where(mc == 0, -1.0e9, attn_cur)
    return jax.nn.softmax(attn_cur, axis=-1).reshape(B, N, Lc)


if __name__ == "__main__":
    # Small shapes consistent with the module's forward.
    B, N, Lc, Lt, D = 2, 4, 8, 16, 32

    key = jax.random.PRNGKey(0)
    k0, k1, k2, k3, k4, k5 = jax.random.split(key, 6)

    seq_cur = jax.random.normal(k0, (B, N, Lc, D), dtype=jnp.float32)
    seq_total = jax.random.normal(k1, (B, N, Lt, D), dtype=jnp.float32)
    mask_cur = (jax.random.uniform(k2, (B, N, Lc)) > 0.2).astype(jnp.float32)
    mask_total = (jax.random.uniform(k3, (B, N, Lt)) > 0.2).astype(jnp.float32)

    # Deterministic parameter init (synthetic; nn.Linear(d_model, d_model, bias=False)).
    w1 = jax.random.normal(k4, (D, D), dtype=jnp.float32) * (1.0 / math.sqrt(D))
    w2 = jax.random.normal(k5, (D, D), dtype=jnp.float32) * (1.0 / math.sqrt(D))

    out = jax.block_until_ready(
        self_attention(seq_cur, seq_total, mask_cur, mask_total, w1, w2, reverse=False))
    ref = self_attention_ref(seq_cur, seq_total, mask_cur, mask_total, w1, w2, reverse=False)

    assert out.shape == (B, N, Lc)
    # Both sides are f32-accurate (kernel: f32 MXU accumulation, exact softmax
    # divide; reference: HIGHEST precision), so a tight tolerance is safe.
    assert jnp.allclose(out, ref, rtol=5e-3, atol=2e-3), "mismatch vs reference"

    # Also exercise the reverse=True path once.
    out_rev = jax.block_until_ready(
        self_attention(seq_cur, seq_total, mask_cur, mask_total, w1, w2, reverse=True))
    ref_rev = self_attention_ref(seq_cur, seq_total, mask_cur, mask_total, w1, w2, reverse=True)
    assert jnp.allclose(out_rev, ref_rev, rtol=5e-3, atol=2e-3), "mismatch vs reference (reverse)"

    print("KERNEL_OK")
</pallas_src>

<mosaic_0001>
module attributes {stable_mosaic.version = 11 : i64} {
  func.func @self_attention_kernel(%arg0: i32, %arg1: memref<64x32xf32, #tpu.memory_space<vmem>>, %arg2: memref<128x32xf32, #tpu.memory_space<vmem>>, %arg3: memref<8x8xf32, #tpu.memory_space<vmem>>, %arg4: memref<8x16xf32, #tpu.memory_space<vmem>>, %arg5: memref<32x32xf32, #tpu.memory_space<vmem>>, %arg6: memref<32x32xf32, #tpu.memory_space<vmem>>, %arg7: memref<8x8xf32, #tpu.memory_space<vmem>>) attributes {dimension_semantics = [#tpu.dimension_semantics<parallel>], iteration_bounds = array<i64: 1>, scalar_prefetch = 0 : i64, scratch_operands = 0 : i64, tpu.core_type = #tpu.core_type<tc>, window_params = [{transform_indices = @transform_0, window_bounds = array<i64: 64, 32>}, {transform_indices = @transform_1, window_bounds = array<i64: 128, 32>}, {transform_indices = @transform_2, window_bounds = array<i64: 8, 8>}, {transform_indices = @transform_3, window_bounds = array<i64: 8, 16>}, {pipeline_mode = #tpu.pipeline_mode<synchronous>, transform_indices = @transform_4, window_bounds = array<i64: 32, 32>}, {pipeline_mode = #tpu.pipeline_mode<synchronous>, transform_indices = @transform_5, window_bounds = array<i64: 32, 32>}, {transform_indices = @transform_6, window_bounds = array<i64: 8, 8>}]} {
    %c0 = arith.constant 0 : index
    %c0_0 = arith.constant 0 : index
    %0 = vector.load %arg1[%c0, %c0_0] : memref<64x32xf32, #tpu.memory_space<vmem>>, vector<64x32xf32>
    %c0_1 = arith.constant 0 : index
    %c0_2 = arith.constant 0 : index
    %1 = vector.load %arg5[%c0_1, %c0_2] : memref<32x32xf32, #tpu.memory_space<vmem>>, vector<32x32xf32>
    %cst = arith.constant dense<0.000000e+00> : vector<64x32xf32>
    %2 = tpu.matmul %0, %1, %cst {dimension_numbers = #tpu.dot_dimension_numbers<[1], [0], [0], [1], [0, 0, 1, 1], [], []>} : vector<64x32xf32>, vector<32x32xf32>, vector<64x32xf32> -> vector<64x32xf32>
    %cst_3 = arith.constant 0.000000e+00 : f32
    %3 = vector.broadcast %cst_3 : f32 to vector<64x32xf32>
    %4 = arith.cmpf oge, %2, %3 : vector<64x32xf32>
    %cst_4 = arith.constant 0.00999999977 : f32
    %5 = vector.broadcast %cst_4 : f32 to vector<64x32xf32>
    %6 = arith.mulf %5, %2 : vector<64x32xf32>
    %7 = arith.select %4, %2, %6 : vector<64x32xi1>, vector<64x32xf32>
    %c0_5 = arith.constant 0 : index
    %c0_6 = arith.constant 0 : index
    %8 = vector.load %arg2[%c0_5, %c0_6] : memref<128x32xf32, #tpu.memory_space<vmem>>, vector<128x32xf32>
    %c0_7 = arith.constant 0 : index
    %c0_8 = arith.constant 0 : index
    %9 = vector.load %arg6[%c0_7, %c0_8] : memref<32x32xf32, #tpu.memory_space<vmem>>, vector<32x32xf32>
    %cst_9 = arith.constant dense<0.000000e+00> : vector<128x32xf32>
    %10 = tpu.matmul %8, %9, %cst_9 {dimension_numbers = #tpu.dot_dimension_numbers<[1], [0], [0], [1], [0, 0, 1, 1], [], []>} : vector<128x32xf32>, vector<32x32xf32>, vector<128x32xf32> -> vector<128x32xf32>
    %cst_10 = arith.constant 0.000000e+00 : f32
    %11 = vector.broadcast %cst_10 : f32 to vector<128x32xf32>
    %12 = arith.cmpf oge, %10, %11 : vector<128x32xf32>
    %cst_11 = arith.constant 0.00999999977 : f32
    %13 = vector.broadcast %cst_11 : f32 to vector<128x32xf32>
    %14 = arith.mulf %13, %10 : vector<128x32xf32>
    %15 = arith.select %12, %10, %14 : vector<128x32xi1>, vector<128x32xf32>
    %c0_12 = arith.constant 0 : index
    %c0_13 = arith.constant 0 : index
    %16 = vector.load %arg4[%c0_12, %c0_13] : memref<8x16xf32, #tpu.memory_space<vmem>>, vector<8x16xf32>
    %17 = vector.shape_cast %15 : vector<128x32xf32> to vector<8x16x32xf32>
    %18 = vector.shape_cast %16 : vector<8x16xf32> to vector<8x16x1xf32>
    %19 = vector.broadcast %18 : vector<8x16x1xf32> to vector<8x16x32xf32>
    %20 = arith.mulf %17, %19 : vector<8x16x32xf32>
    %cst_14 = arith.constant dense<0.000000e+00> : vector<8x32xf32>
    %21 = vector.multi_reduction <add>, %20, %cst_14 [1] : vector<8x16x32xf32> to vector<8x32xf32>
    %22 = vector.shape_cast %7 : vector<64x32xf32> to vector<8x8x32xf32>
    %23 = vector.shape_cast %21 : vector<8x32xf32> to vector<8x1x32xf32>
    %24 = vector.broadcast %23 : vector<8x1x32xf32> to vector<8x8x32xf32>
    %25 = arith.mulf %22, %24 : vector<8x8x32xf32>
    %cst_15 = arith.constant dense<0.000000e+00> : vector<8x8xf32>
    %26 = vector.multi_reduction <add>, %25, %cst_15 [2] : vector<8x8x32xf32> to vector<8x8xf32>
    %cst_16 = arith.constant 0.176776692 : f32
    %27 = vector.broadcast %cst_16 : f32 to vector<8x8xf32>
    %28 = arith.mulf %26, %27 : vector<8x8xf32>
    %29 = tpu.transpose %28, [1, 0] : vector<8x8xf32> -> vector<8x8xf32>
    %c0_17 = arith.constant 0 : index
    %c0_18 = arith.constant 0 : index
    %30 = vector.load %arg3[%c0_17, %c0_18] : memref<8x8xf32, #tpu.memory_space<vmem>>, vector<8x8xf32>
    %cst_19 = arith.constant 0.000000e+00 : f32
    %31 = vector.broadcast %cst_19 : f32 to vector<8x8xf32>
    %32 = arith.cmpf oeq, %30, %31 : vector<8x8xf32>
    %cst_20 = arith.constant -1.000000e+09 : f32
    %33 = vector.broadcast %cst_20 : f32 to vector<8x8xf32>
    %34 = arith.select %32, %33, %29 : vector<8x8xi1>, vector<8x8xf32>
    %cst_21 = arith.constant dense<0xFF800000> : vector<8xf32>
    %35 = vector.multi_reduction <maximumf>, %34, %cst_21 [0] : vector<8x8xf32> to vector<8xf32>
    %36 = vector.shape_cast %35 : vector<8xf32> to vector<1x8xf32>
    %37 = vector.broadcast %36 : vector<1x8xf32> to vector<8x8xf32>
    %38 = arith.subf %34, %37 : vector<8x8xf32>
    %39 = math.exp %38 : vector<8x8xf32>
    %cst_22 = arith.constant dense<0.000000e+00> : vector<8xf32>
    %40 = vector.multi_reduction <add>, %39, %cst_22 [0] : vector<8x8xf32> to vector<8xf32>
    %41 = vector.shape_cast %40 : vector<8xf32> to vector<1x8xf32>
    %42 = vector.broadcast %41 : vector<1x8xf32> to vector<8x8xf32>
    %43 = arith.divf %39, %42 : vector<8x8xf32>
    %c0_23 = arith.constant 0 : index
    %c0_24 = arith.constant 0 : index
    %44 = vector.load %arg7[%c0_23, %c0_24] : memref<8x8xf32, #tpu.memory_space<vmem>>, vector<8x8xf32>
    tpu.vector_store %arg7[%c0_23, %c0_24], %43 {strides = array<i32>} : memref<8x8xf32, #tpu.memory_space<vmem>>, vector<8x8xf32>,
    return
  }
  func.func @transform_0(%arg0: i32) -> (i32, i32) {
    %c0_i32 = arith.constant 0 : i32
    %c0_i32_0 = arith.constant 0 : i32
    return %arg0, %c0_i32 : i32, i32
  }
  func.func @transform_1(%arg0: i32) -> (i32, i32) {
    %c0_i32 = arith.constant 0 : i32
    %c0_i32_0 = arith.constant 0 : i32
    return %arg0, %c0_i32 : i32, i32
  }
  func.func @transform_2(%arg0: i32) -> (i32, i32) {
    %c0_i32 = arith.constant 0 : i32
    %c0_i32_0 = arith.constant 0 : i32
    return %c0_i32, %arg0 : i32, i32
  }
  func.func @transform_3(%arg0: i32) -> (i32, i32) {
    %c0_i32 = arith.constant 0 : i32
    %c0_i32_0 = arith.constant 0 : i32
    return %arg0, %c0_i32 : i32, i32
  }
  func.func @transform_4(%arg0: i32) -> (i32, i32) {
    %c0_i32 = arith.constant 0 : i32
    %c0_i32_0 = arith.constant 0 : i32
    %c0_i32_1 = arith.constant 0 : i32
    return %c0_i32, %c0_i32_0 : i32, i32
  }
  func.func @transform_5(%arg0: i32) -> (i32, i32) {
    %c0_i32 = arith.constant 0 : i32
    %c0_i32_0 = arith.constant 0 : i32
    %c0_i32_1 = arith.constant 0 : i32
    return %c0_i32, %c0_i32_0 : i32, i32
  }
  func.func @transform_6(%arg0: i32) -> (i32, i32) {
    %c0_i32 = arith.constant 0 : i32
    %c0_i32_0 = arith.constant 0 : i32
    return %c0_i32, %arg0 : i32, i32
  }
}

</mosaic_0001>

<llo_original>
// kernel: tpu_custom_call.1
$region0: #{tpu_custom_call.1}
  #allocation0 [shape = 'u32[]', space=smem, size = 0x4, offset = 0x4, fixed_abs, tag = 'smem constant byte address 0x4 - core index']
  #allocation1 [shape = 'u32[144,128]{1,0:T(1,128)}', space=vmem, size = 0x12000, scoped, tag = 'internal scratch']
  %s0 = inlined_call_operand.vmem [shape: f32[64,32], index: 0, kind: input, shape index: {}]
  %s1 = inlined_call_operand.vmem [shape: f32[128,32], index: 1, kind: input, shape index: {}]
  %s2 = inlined_call_operand.vmem [shape: f32[8,8], index: 2, kind: input, shape index: {}]
  %s3 = inlined_call_operand.vmem [shape: f32[8,16], index: 3, kind: input, shape index: {}]
  %s4 = inlined_call_operand.vmem [shape: f32[32,32], index: 4, kind: input, shape index: {}]
  %s5 = inlined_call_operand.vmem [shape: f32[32,32], index: 5, kind: input, shape index: {}]
  %s6 = inlined_call_operand.hbm [shape: f32[8,8], index: 6, kind: output, shape index: {}]
  %s7 = sld [smem:[#allocation0]]
  $region34: #{tpu_custom_call.1} parent=0
    _
  %s9 = ssub.s32 1, %s7
  %s10 = scalar_select 0, %s9, %s7
  $region1: #{tpu_custom_call.1} parent=0
    #allocation2 [shape = 'u8[4096]{0}', space=vmem, size = 0x1000, scoped, tag = 'output window, operand 0, single buffered']
    #allocation3 [shape = 's32[1]{0}', space=sflag, size = 0x4, scoped, tag = 'scoped memory for tpu_custom_call.1']
    %11 = vsyncpa [#allocation3], 0
    // Predicated region
    $region2: #{tpu_custom_call.1} parent=1 // pred_check
      _
    $region3: #{tpu_custom_call.1} parent=1 // pred_check_branch
      %13 = sbr.rel (0) target = $region5
    $region4: #{tpu_custom_call.1} parent=1 // pred_region
      _
    $region5: #{tpu_custom_call.1} parent=1 // pred_fallthru
      _
    // Predicated region
    $region6: #{tpu_custom_call.1} parent=1 // pred_check
      _
    $region7: #{tpu_custom_call.1} parent=1 // pred_check_branch
      %15 = sbr.rel (0) target = $region9
    $region8: #{tpu_custom_call.1} parent=1 // pred_region
      _
    $region9: #{tpu_custom_call.1} parent=1 // pred_fallthru
      _
    // Predicated region
    $region10: #{tpu_custom_call.1} parent=1 // pred_check
      _
    $region11: #{tpu_custom_call.1} parent=1 // pred_check_branch
      %17 = sbr.rel (0) target = $region13
    $region12: #{tpu_custom_call.1} parent=1 // pred_region
      _
    $region13: #{tpu_custom_call.1} parent=1 // pred_fallthru
      _
    // Predicated region
    $region14: #{tpu_custom_call.1} parent=1 // pred_check
      _
    $region15: #{tpu_custom_call.1} parent=1 // pred_check_branch
      %19 = sbr.rel (0) target = $region17
    $region16: #{tpu_custom_call.1} parent=1 // pred_region
      _
    $region17: #{tpu_custom_call.1} parent=1 // pred_fallthru
      _
    // Predicated region
    $region18: #{tpu_custom_call.1} parent=1 // pred_check
      _
    $region19: #{tpu_custom_call.1} parent=1 // pred_check_branch
      %21 = sbr.rel (0) target = $region21
    $region20: #{tpu_custom_call.1} parent=1 // pred_region
      _
    $region21: #{tpu_custom_call.1} parent=1 // pred_fallthru
      _
    // Predicated region
    $region22: #{tpu_custom_call.1} parent=1 // pred_check
      _
    $region23: #{tpu_custom_call.1} parent=1 // pred_check_branch
      %23 = sbr.rel (0) target = $region25
    $region24: #{tpu_custom_call.1} parent=1 // pred_region
      _
    $region25: #{tpu_custom_call.1} parent=1 // pred_fallthru
      _
    %v24 = vld [vmem:[%s0] sm:$0xff]
    %v25 = vld [vmem:[%s0 + $0x8] sm:$0xff]
    %v26 = vld [vmem:[%s0 + $0x10] sm:$0xff]
    %v27 = vld [vmem:[%s0 + $0x18] sm:$0xff]
    %v28 = vld [vmem:[%s0 + $0x20] sm:$0xff]
    %v29 = vld [vmem:[%s0 + $0x28] sm:$0xff]
    %v30 = vld [vmem:[%s0 + $0x30] sm:$0xff]
    %v31 = vld [vmem:[%s0 + $0x38] sm:$0xff]
    %v32 = vld [vmem:[%s4] sm:$0xff]
    %v33 = vld [vmem:[%s4 + $0x8] sm:$0xff]
    %v34 = vld [vmem:[%s4 + $0x10] sm:$0xff]
    %v35 = vld [vmem:[%s4 + $0x18] sm:$0xff]
    %vm36 = vcmask 261120
    %v38 = vsel %vm36, %v24, 0
    %v41 = vsel %vm36, %v25, 0
    %v44 = vsel %vm36, %v26, 0
    %v47 = vsel %vm36, %v27, 0
    %v50 = vsel %vm36, %v28, 0
    %v53 = vsel %vm36, %v29, 0
    %v56 = vsel %vm36, %v30, 0
    %v59 = vsel %vm36, %v31, 0
    %61 = vmatprep.subr.mxu0 0.0
    %62 = vmatpush1.msra.mxu0 %v32
    %63 = vmatprep.subr.mxu0 0.0
    %64 = vmatpush1.msra.mxu0 %v33
    %65 = vmatprep.subr.mxu0 0.0
    %66 = vmatpush1.msra.mxu0 %v34
    %67 = vmatprep.subr.mxu0 0.0
    %68 = vmatpush1.msra.mxu0 %v35
    %69 = vmatprep.subr.mxu0 0.0
    %70 = vmatpush1.msra.mxu0 0.0
    %71 = vmatprep.subr.mxu0 0.0
    %72 = vmatpush1.msra.mxu0 0.0
    %73 = vmatprep.subr.mxu0 0.0
    %74 = vmatpush1.msra.mxu0 0.0
    %75 = vmatprep.subr.mxu0 0.0
    %76 = vmatpush1.msra.mxu0 0.0
    %77 = vmatprep.subr.mxu0 0.0
    %78 = vmatpush1.msra.mxu0 0.0
    %79 = vmatprep.subr.mxu0 0.0
    %80 = vmatpush1.msra.mxu0 0.0
    %81 = vmatprep.subr.mxu0 0.0
    %82 = vmatpush1.msra.mxu0 0.0
    %83 = vmatprep.subr.mxu0 0.0
    %84 = vmatpush1.msra.mxu0 0.0
    %85 = vmatprep.subr.mxu0 0.0
    %86 = vmatpush1.msra.mxu0 0.0
    %87 = vmatprep.subr.mxu0 0.0
    %88 = vmatpush1.msra.mxu0 0.0
    %89 = vmatprep.subr.mxu0 0.0
    %90 = vmatpush1.msra.mxu0 0.0
    %91 = vmatprep.subr.mxu0 0.0
    %92 = vmatpush1.msra.mxu0 0.0
    %93 = vmatprep.subr.mxu0 0.0
    %94 = vmatpush1.msra.mxu0 0.0
    %95 = vmatprep.subr.mxu0 0.0
    %96 = vmatpush1.msra.mxu0 0.0
    %97 = vmatprep.subr.mxu0 0.0
    %98 = vmatpush1.msra.mxu0 0.0
    %99 = vmatprep.subr.mxu0 0.0
    %100 = vmatpush1.msra.mxu0 0.0
    %101 = vmatprep.subr.mxu0 0.0
    %102 = vmatpush1.msra.mxu0 0.0
    %103 = vmatprep.subr.mxu0 0.0
    %104 = vmatpush1.msra.mxu0 0.0
    %105 = vmatprep.subr.mxu0 0.0
    %106 = vmatpush1.msra.mxu0 0.0
    %107 = vmatprep.subr.mxu0 0.0
    %108 = vmatpush1.msra.mxu0 0.0
    %109 = vmatprep.subr.mxu0 0.0
    %110 = vmatpush1.msra.mxu0 0.0
    %111 = vmatprep.subr.mxu0 0.0
    %112 = vmatpush1.msra.mxu0 0.0
    %113 = vmatprep.subr.mxu0 0.0
    %114 = vmatpush1.msra.mxu0 0.0
    %115 = vmatprep.subr.mxu0 0.0
    %116 = vmatpush1.msra.mxu0 0.0
    %117 = vmatprep.subr.mxu0 0.0
    %118 = vmatpush1.msra.mxu0 0.0
    %119 = vmatprep.subr.mxu0 0.0
    %120 = vmatpush1.msra.mxu0 0.0
    %121 = vmatprep.subr.mxu0 0.0
    %122 = vmatpush1.msra.mxu0 0.0
    %123 = vmatprep.subr.mxu0 0.0
    %124 = vmatpush1.msra.mxu0 0.0
    %125 = vmatprep.mubr.f32.mxu0 0.0
    %126 = vmatmul.mubr.f32.gmra.mrb[0].mxu0 %v38
    %v127 = vpop.f32.mrb[0].mxu0
    %v128 = vadd.f32 0.0, %v127
    %v129 = vpop.f32.mrb[0].mxu0
    %130 = vmatprep.mubr.f32.mxu0 0.0
    %131 = vmatmul.mubr.f32.gmra.mrb[0].mxu0 %v41
    %v132 = vpop.f32.mrb[0].mxu0
    %v133 = vadd.f32 0.0, %v132
    %v134 = vpop.f32.mrb[0].mxu0
    %135 = vmatprep.mubr.f32.mxu0 0.0
    %136 = vmatmul.mubr.f32.gmra.mrb[0].mxu0 %v44
    %v137 = vpop.f32.mrb[0].mxu0
    %v138 = vadd.f32 0.0, %v137
    %v139 = vpop.f32.mrb[0].mxu0
    %140 = vmatprep.mubr.f32.mxu0 0.0
    %141 = vmatmul.mubr.f32.gmra.mrb[0].mxu0 %v47
    %v142 = vpop.f32.mrb[0].mxu0
    %v143 = vadd.f32 0.0, %v142
    %v144 = vpop.f32.mrb[0].mxu0
    %145 = vmatprep.mubr.f32.mxu0 0.0
    %146 = vmatmul.mubr.f32.gmra.mrb[0].mxu0 %v50
    %v147 = vpop.f32.mrb[0].mxu0
    %v148 = vadd.f32 0.0, %v147
    %v149 = vpop.f32.mrb[0].mxu0
    %150 = vmatprep.mubr.f32.mxu0 0.0
    %151 = vmatmul.mubr.f32.gmra.mrb[0].mxu0 %v53
    %v152 = vpop.f32.mrb[0].mxu0
    %v153 = vadd.f32 0.0, %v152
    %v154 = vpop.f32.mrb[0].mxu0
    %155 = vmatprep.mubr.f32.mxu0 0.0
    %156 = vmatmul.mubr.f32.gmra.mrb[0].mxu0 %v56
    %v157 = vpop.f32.mrb[0].mxu0
    %v158 = vadd.f32 0.0, %v157
    %v159 = vpop.f32.mrb[0].mxu0
    %160 = vmatprep.mubr.f32.mxu0 0.0
    %161 = vmatmul.mubr.f32.gmra.mrb[0].mxu0 %v59
    %v162 = vpop.f32.mrb[0].mxu0
    %v163 = vadd.f32 0.0, %v162
    %v164 = vpop.f32.mrb[0].mxu0
    %165 = vdwg.mxu0
    %vm166 = vcmp.ge.f32.partialorder %v128, 0.0
    %vm167 = vcmp.ge.f32.partialorder %v133, 0.0
    %vm168 = vcmp.ge.f32.partialorder %v138, 0.0
    %vm169 = vcmp.ge.f32.partialorder %v143, 0.0
    %vm170 = vcmp.ge.f32.partialorder %v148, 0.0
    %vm171 = vcmp.ge.f32.partialorder %v153, 0.0
    %vm172 = vcmp.ge.f32.partialorder %v158, 0.0
    %vm173 = vcmp.ge.f32.partialorder %v163, 0.0
    %v174 = vmul.f32 %v128, 0.01
    %v175 = vmul.f32 %v133, 0.01
    %v176 = vmul.f32 %v138, 0.01
    %v177 = vmul.f32 %v143, 0.01
    %v178 = vmul.f32 %v148, 0.01
    %v179 = vmul.f32 %v153, 0.01
    %v180 = vmul.f32 %v158, 0.01
    %v181 = vmul.f32 %v163, 0.01
    %v182 = vsel %vm166, %v128, %v174
    %v183 = vsel %vm167, %v133, %v175
    %v184 = vsel %vm168, %v138, %v176
    %v185 = vsel %vm169, %v143, %v177
    %v186 = vsel %vm170, %v148, %v178
    %v187 = vsel %vm171, %v153, %v179
    %v188 = vsel %vm172, %v158, %v180
    %v189 = vsel %vm173, %v163, %v181
    %v190 = vld [vmem:[%s1] sm:$0xff]
    %v191 = vld [vmem:[%s1 + $0x8] sm:$0xff]
    %v192 = vld [vmem:[%s1 + $0x10] sm:$0xff]
    %v193 = vld [vmem:[%s1 + $0x18] sm:$0xff]
    %v194 = vld [vmem:[%s1 + $0x20] sm:$0xff]
    %v195 = vld [vmem:[%s1 + $0x28] sm:$0xff]
    %v196 = vld [vmem:[%s1 + $0x30] sm:$0xff]
    %v197 = vld [vmem:[%s1 + $0x38] sm:$0xff]
    %v198 = vld [vmem:[%s1 + $0x40] sm:$0xff]
    %v199 = vld [vmem:[%s1 + $0x48] sm:$0xff]
    %v200 = vld [vmem:[%s1 + $0x50] sm:$0xff]
    %v201 = vld [vmem:[%s1 + $0x58] sm:$0xff]
    %v202 = vld [vmem:[%s1 + $0x60] sm:$0xff]
    %v203 = vld [vmem:[%s1 + $0x68] sm:$0xff]
    %v204 = vld [vmem:[%s1 + $0x70] sm:$0xff]
    %v205 = vld [vmem:[%s1 + $0x78] sm:$0xff]
    %v206 = vld [vmem:[%s5] sm:$0xff]
    %v207 = vld [vmem:[%s5 + $0x8] sm:$0xff]
    %v208 = vld [vmem:[%s5 + $0x10] sm:$0xff]
    %v209 = vld [vmem:[%s5 + $0x18] sm:$0xff]
    %v211 = vsel %vm36, %v190, 0
    %v214 = vsel %vm36, %v191, 0
    %v217 = vsel %vm36, %v192, 0
    %v220 = vsel %vm36, %v193, 0
    %v223 = vsel %vm36, %v194, 0
    %v226 = vsel %vm36, %v195, 0
    %v229 = vsel %vm36, %v196, 0
    %v232 = vsel %vm36, %v197, 0
    %v235 = vsel %vm36, %v198, 0
    %v238 = vsel %vm36, %v199, 0
    %v241 = vsel %vm36, %v200, 0
    %v244 = vsel %vm36, %v201, 0
    %v247 = vsel %vm36, %v202, 0
    %v250 = vsel %vm36, %v203, 0
    %v253 = vsel %vm36, %v204, 0
    %v256 = vsel %vm36, %v205, 0
    %258 = vmatprep.subr.mxu0 0.0
    %259 = vmatpush1.msra.mxu0 %v206
    %260 = vmatprep.subr.mxu0 0.0
    %261 = vmatpush1.msra.mxu0 %v207
    %262 = vmatprep.subr.mxu0 0.0
    %263 = vmatpush1.msra.mxu0 %v208
    %264 = vmatprep.subr.mxu0 0.0
    %265 = vmatpush1.msra.mxu0 %v209
    %266 = vmatprep.subr.mxu0 0.0
    %267 = vmatpush1.msra.mxu0 0.0
    %268 = vmatprep.subr.mxu0 0.0
    %269 = vmatpush1.msra.mxu0 0.0
    %270 = vmatprep.subr.mxu0 0.0
    %271 = vmatpush1.msra.mxu0 0.0
    %272 = vmatprep.subr.mxu0 0.0
    %273 = vmatpush1.msra.mxu0 0.0
    %274 = vmatprep.subr.mxu0 0.0
    %275 = vmatpush1.msra.mxu0 0.0
    %276 = vmatprep.subr.mxu0 0.0
    %277 = vmatpush1.msra.mxu0 0.0
    %278 = vmatprep.subr.mxu0 0.0
    %279 = vmatpush1.msra.mxu0 0.0
    %280 = vmatprep.subr.mxu0 0.0
    %281 = vmatpush1.msra.mxu0 0.0
    %282 = vmatprep.subr.mxu0 0.0
    %283 = vmatpush1.msra.mxu0 0.0
    %284 = vmatprep.subr.mxu0 0.0
    %285 = vmatpush1.msra.mxu0 0.0
    %286 = vmatprep.subr.mxu0 0.0
    %287 = vmatpush1.msra.mxu0 0.0
    %288 = vmatprep.subr.mxu0 0.0
    %289 = vmatpush1.msra.mxu0 0.0
    %290 = vmatprep.subr.mxu0 0.0
    %291 = vmatpush1.msra.mxu0 0.0
    %292 = vmatprep.subr.mxu0 0.0
    %293 = vmatpush1.msra.mxu0 0.0
    %294 = vmatprep.subr.mxu0 0.0
    %295 = vmatpush1.msra.mxu0 0.0
    %296 = vmatprep.subr.mxu0 0.0
    %297 = vmatpush1.msra.mxu0 0.0
    %298 = vmatprep.subr.mxu0 0.0
    %299 = vmatpush1.msra.mxu0 0.0
    %300 = vmatprep.subr.mxu0 0.0
    %301 = vmatpush1.msra.mxu0 0.0
    %302 = vmatprep.subr.mxu0 0.0
    %303 = vmatpush1.msra.mxu0 0.0
    %304 = vmatprep.subr.mxu0 0.0
    %305 = vmatpush1.msra.mxu0 0.0
    %306 = vmatprep.subr.mxu0 0.0
    %307 = vmatpush1.msra.mxu0 0.0
    %308 = vmatprep.subr.mxu0 0.0
    %309 = vmatpush1.msra.mxu0 0.0
    %310 = vmatprep.subr.mxu0 0.0
    %311 = vmatpush1.msra.mxu0 0.0
    %312 = vmatprep.subr.mxu0 0.0
    %313 = vmatpush1.msra.mxu0 0.0
    %314 = vmatprep.subr.mxu0 0.0
    %315 = vmatpush1.msra.mxu0 0.0
    %316 = vmatprep.subr.mxu0 0.0
    %317 = vmatpush1.msra.mxu0 0.0
    %318 = vmatprep.subr.mxu0 0.0
    %319 = vmatpush1.msra.mxu0 0.0
    %320 = vmatprep.subr.mxu0 0.0
    %321 = vmatpush1.msra.mxu0 0.0
    %322 = vmatprep.mubr.f32.mxu0 0.0
    %323 = vmatmul.mubr.f32.gmra.mrb[0].mxu0 %v211
    %v324 = vpop.f32.mrb[0].mxu0
    %v325 = vadd.f32 0.0, %v324
    %v326 = vpop.f32.mrb[0].mxu0
    %327 = vmatprep.mubr.f32.mxu0 0.0
    %328 = vmatmul.mubr.f32.gmra.mrb[0].mxu0 %v214
    %v329 = vpop.f32.mrb[0].mxu0
    %v330 = vadd.f32 0.0, %v329
    %v331 = vpop.f32.mrb[0].mxu0
    %332 = vmatprep.mubr.f32.mxu0 0.0
    %333 = vmatmul.mubr.f32.gmra.mrb[0].mxu0 %v217
    %v334 = vpop.f32.mrb[0].mxu0
    %v335 = vadd.f32 0.0, %v334
    %v336 = vpop.f32.mrb[0].mxu0
    %337 = vmatprep.mubr.f32.mxu0 0.0
    %338 = vmatmul.mubr.f32.gmra.mrb[0].mxu0 %v220
    %v339 = vpop.f32.mrb[0].mxu0
    %v340 = vadd.f32 0.0, %v339
    %v341 = vpop.f32.mrb[0].mxu0
    %342 = vmatprep.mubr.f32.mxu0 0.0
    %343 = vmatmul.mubr.f32.gmra.mrb[0].mxu0 %v223
    %v344 = vpop.f32.mrb[0].mxu0
    %v345 = vadd.f32 0.0, %v344
    %v346 = vpop.f32.mrb[0].mxu0
    %347 = vmatprep.mubr.f32.mxu0 0.0
    %348 = vmatmul.mubr.f32.gmra.mrb[0].mxu0 %v226
    %v349 = vpop.f32.mrb[0].mxu0
    %v350 = vadd.f32 0.0, %v349
    %v351 = vpop.f32.mrb[0].mxu0
    %352 = vmatprep.mubr.f32.mxu0 0.0
    %353 = vmatmul.mubr.f32.gmra.mrb[0].mxu0 %v229
    %v354 = vpop.f32.mrb[0].mxu0
    %v355 = vadd.f32 0.0, %v354
    %v356 = vpop.f32.mrb[0].mxu0
    %357 = vmatprep.mubr.f32.mxu0 0.0
    %358 = vmatmul.mubr.f32.gmra.mrb[0].mxu0 %v232
    %v359 = vpop.f32.mrb[0].mxu0
    %v360 = vadd.f32 0.0, %v359
    %v361 = vpop.f32.mrb[0].mxu0
    %362 = vmatprep.mubr.f32.mxu0 0.0
    %363 = vmatmul.mubr.f32.gmra.mrb[0].mxu0 %v235
    %v364 = vpop.f32.mrb[0].mxu0
    %v365 = vadd.f32 0.0, %v364
    %v366 = vpop.f32.mrb[0].mxu0
    %367 = vmatprep.mubr.f32.mxu0 0.0
    %368 = vmatmul.mubr.f32.gmra.mrb[0].mxu0 %v238
    %v369 = vpop.f32.mrb[0].mxu0
    %v370 = vadd.f32 0.0, %v369
    %v371 = vpop.f32.mrb[0].mxu0
    %372 = vmatprep.mubr.f32.mxu0 0.0
    %373 = vmatmul.mubr.f32.gmra.mrb[0].mxu0 %v241
    %v374 = vpop.f32.mrb[0].mxu0
    %v375 = vadd.f32 0.0, %v374
    %v376 = vpop.f32.mrb[0].mxu0
    %377 = vmatprep.mubr.f32.mxu0 0.0
    %378 = vmatmul.mubr.f32.gmra.mrb[0].mxu0 %v244
    %v379 = vpop.f32.mrb[0].mxu0
    %v380 = vadd.f32 0.0, %v379
    %v381 = vpop.f32.mrb[0].mxu0
    %382 = vmatprep.mubr.f32.mxu0 0.0
    %383 = vmatmul.mubr.f32.gmra.mrb[0].mxu0 %v247
    %v384 = vpop.f32.mrb[0].mxu0
    %v385 = vadd.f32 0.0, %v384
    %v386 = vpop.f32.mrb[0].mxu0
    %387 = vmatprep.mubr.f32.mxu0 0.0
    %388 = vmatmul.mubr.f32.gmra.mrb[0].mxu0 %v250
    %v389 = vpop.f32.mrb[0].mxu0
    %v390 = vadd.f32 0.0, %v389
    %v391 = vpop.f32.mrb[0].mxu0
    %392 = vmatprep.mubr.f32.mxu0 0.0
    %393 = vmatmul.mubr.f32.gmra.mrb[0].mxu0 %v253
    %v394 = vpop.f32.mrb[0].mxu0
    %v395 = vadd.f32 0.0, %v394
    %v396 = vpop.f32.mrb[0].mxu0
    %397 = vmatprep.mubr.f32.mxu0 0.0
    %398 = vmatmul.mubr.f32.gmra.mrb[0].mxu0 %v256
    %v399 = vpop.f32.mrb[0].mxu0
    %v400 = vadd.f32 0.0, %v399
    %v401 = vpop.f32.mrb[0].mxu0
    %402 = vdwg.mxu0
    %vm403 = vcmp.ge.f32.partialorder %v325, 0.0
    %vm404 = vcmp.ge.f32.partialorder %v330, 0.0
    %vm405 = vcmp.ge.f32.partialorder %v335, 0.0
    %vm406 = vcmp.ge.f32.partialorder %v340, 0.0
    %vm407 = vcmp.ge.f32.partialorder %v345, 0.0
    %vm408 = vcmp.ge.f32.partialorder %v350, 0.0
    %vm409 = vcmp.ge.f32.partialorder %v355, 0.0
    %vm410 = vcmp.ge.f32.partialorder %v360, 0.0
    %vm411 = vcmp.ge.f32.partialorder %v365, 0.0
    %vm412 = vcmp.ge.f32.partialorder %v370, 0.0
    %vm413 = vcmp.ge.f32.partialorder %v375, 0.0
    %vm414 = vcmp.ge.f32.partialorder %v380, 0.0
    %vm415 = vcmp.ge.f32.partialorder %v385, 0.0
    %vm416 = vcmp.ge.f32.partialorder %v390, 0.0
    %vm417 = vcmp.ge.f32.partialorder %v395, 0.0
    %vm418 = vcmp.ge.f32.partialorder %v400, 0.0
    %v419 = vmul.f32 %v325, 0.01
    %v420 = vmul.f32 %v330, 0.01
    %v421 = vmul.f32 %v335, 0.01
    %v422 = vmul.f32 %v340, 0.01
    %v423 = vmul.f32 %v345, 0.01
    %v424 = vmul.f32 %v350, 0.01
    %v425 = vmul.f32 %v355, 0.01
    %v426 = vmul.f32 %v360, 0.01
    %v427 = vmul.f32 %v365, 0.01
    %v428 = vmul.f32 %v370, 0.01
    %v429 = vmul.f32 %v375, 0.01
    %v430 = vmul.f32 %v380, 0.01
    %v431 = vmul.f32 %v385, 0.01
    %v432 = vmul.f32 %v390, 0.01
    %v433 = vmul.f32 %v395, 0.01
    %v434 = vmul.f32 %v400, 0.01
    %v435 = vsel %vm403, %v325, %v419
    %v436 = vsel %vm404, %v330, %v420
    %v437 = vsel %vm405, %v335, %v421
    %v438 = vsel %vm406, %v340, %v422
    %v439 = vsel %vm407, %v345, %v423
    %v440 = vsel %vm408, %v350, %v424
    %v441 = vsel %vm409, %v355, %v425
    %v442 = vsel %vm410, %v360, %v426
    %v443 = vsel %vm411, %v365, %v427
    %v444 = vsel %vm412, %v370, %v428
    %v445 = vsel %vm413, %v375, %v429
    %v446 = vsel %vm414, %v380, %v430
    %v447 = vsel %vm415, %v385, %v431
    %v448 = vsel %vm416, %v390, %v432
    %v449 = vsel %vm417, %v395, %v433
    %v450 = vsel %vm418, %v400, %v434
    %v451 = vld [vmem:[%s3] sm:$0xff]
    %v452 = vlaneseq
    %v453 = vshrl.u32 %v452, 7
    %v454 = vsub.s32 0, %v453
    %v455 = vrot.slane %v451, %v454
    %457 = vbcast.lane.b32.xlu0 %v455, 256
    %v458 = vpop.permute.xlu0 %457
    %s460 = sor.u32 256, 8
    %461 = vbcast.lane.b32.xlu0 %v455, %s460
    %v462 = vpop.permute.xlu0 %461
    %v463 = vlaneseq
    %v464 = vshrl.u32 %v463, 7
    %v465 = vsub.s32 1, %v464
    %v466 = vrot.slane %v451, %v465
    %468 = vbcast.lane.b32.xlu0 %v466, 256
    %v469 = vpop.permute.xlu0 %468
    %s471 = sor.u32 256, 8
    %472 = vbcast.lane.b32.xlu0 %v466, %s471
    %v473 = vpop.permute.xlu0 %472
    %v474 = vlaneseq
    %v475 = vshrl.u32 %v474, 7
    %v476 = vsub.s32 2, %v475
    %v477 = vrot.slane %v451, %v476
    %479 = vbcast.lane.b32.xlu0 %v477, 256
    %v480 = vpop.permute.xlu0 %479
    %s482 = sor.u32 256, 8
    %483 = vbcast.lane.b32.xlu0 %v477, %s482
    %v484 = vpop.permute.xlu0 %483
    %v485 = vlaneseq
    %v486 = vshrl.u32 %v485, 7
    %v487 = vsub.s32 3, %v486
    %v488 = vrot.slane %v451, %v487
    %490 = vbcast.lane.b32.xlu0 %v488, 256
    %v491 = vpop.permute.xlu0 %490
    %s493 = sor.u32 256, 8
    %494 = vbcast.lane.b32.xlu0 %v488, %s493
    %v495 = vpop.permute.xlu0 %494
    %v496 = vlaneseq
    %v497 = vshrl.u32 %v496, 7
    %v498 = vsub.s32 4, %v497
    %v499 = vrot.slane %v451, %v498
    %501 = vbcast.lane.b32.xlu0 %v499, 256
    %v502 = vpop.permute.xlu0 %501
    %s504 = sor.u32 256, 8
    %505 = vbcast.lane.b32.xlu0 %v499, %s504
    %v506 = vpop.permute.xlu0 %505
    %v507 = vlaneseq
    %v508 = vshrl.u32 %v507, 7
    %v509 = vsub.s32 5, %v508
    %v510 = vrot.slane %v451, %v509
    %512 = vbcast.lane.b32.xlu0 %v510, 256
    %v513 = vpop.permute.xlu0 %512
    %s515 = sor.u32 256, 8
    %516 = vbcast.lane.b32.xlu0 %v510, %s515
    %v517 = vpop.permute.xlu0 %516
    %v518 = vlaneseq
    %v519 = vshrl.u32 %v518, 7
    %v520 = vsub.s32 6, %v519
    %v521 = vrot.slane %v451, %v520
    %523 = vbcast.lane.b32.xlu0 %v521, 256
    %v524 = vpop.permute.xlu0 %523
    %s526 = sor.u32 256, 8
    %527 = vbcast.lane.b32.xlu0 %v521, %s526
    %v528 = vpop.permute.xlu0 %527
    %v529 = vlaneseq
    %v530 = vshrl.u32 %v529, 7
    %v531 = vsub.s32 7, %v530
    %v532 = vrot.slane %v451, %v531
    %534 = vbcast.lane.b32.xlu0 %v532, 256
    %v535 = vpop.permute.xlu0 %534
    %s537 = sor.u32 256, 8
    %538 = vbcast.lane.b32.xlu0 %v532, %s537
    %v539 = vpop.permute.xlu0 %538
    %v540 = vmul.f32 %v435, %v458
    %v541 = vmul.f32 %v436, %v462
    %v542 = vmul.f32 %v437, %v469
    %v543 = vmul.f32 %v438, %v473
    %v544 = vmul.f32 %v439, %v480
    %v545 = vmul.f32 %v440, %v484
    %v546 = vmul.f32 %v441, %v491
    %v547 = vmul.f32 %v442, %v495
    %v548 = vmul.f32 %v443, %v502
    %v549 = vmul.f32 %v444, %v506
    %v550 = vmul.f32 %v445, %v513
    %v551 = vmul.f32 %v446, %v517
    %v552 = vmul.f32 %v447, %v524
    %v553 = vmul.f32 %v448, %v528
    %v554 = vmul.f32 %v449, %v535
    %v555 = vmul.f32 %v450, %v539
    %v556 = vsel %vm36, %v540, 0.0
    %v557 = vsel %vm36, %v541, 0.0
    %v558 = vadd.f32 %v556, %v557
    %v559 = vrot.slane %v558, 4
    %v560 = vadd.f32 %v558, %v559
    %v561 = vrot.slane %v560, 2
    %v562 = vadd.f32 %v560, %v561
    %v563 = vrot.slane %v562, 1
    %v564 = vadd.f32 %v562, %v563
    %v565 = vsel %vm36, %v542, 0.0
    %v566 = vsel %vm36, %v543, 0.0
    %v567 = vadd.f32 %v565, %v566
    %v568 = vrot.slane %v567, 4
    %v569 = vadd.f32 %v567, %v568
    %v570 = vrot.slane %v569, 2
    %v571 = vadd.f32 %v569, %v570
    %v572 = vrot.slane %v571, 1
    %v573 = vadd.f32 %v571, %v572
    %v574 = vsel %vm36, %v544, 0.0
    %v575 = vsel %vm36, %v545, 0.0
    %v576 = vadd.f32 %v574, %v575
    %v577 = vrot.slane %v576, 4
    %v578 = vadd.f32 %v576, %v577
    %v579 = vrot.slane %v578, 2
    %v580 = vadd.f32 %v578, %v579
    %v581 = vrot.slane %v580, 1
    %v582 = vadd.f32 %v580, %v581
    %v583 = vsel %vm36, %v546, 0.0
    %v584 = vsel %vm36, %v547, 0.0
    %v585 = vadd.f32 %v583, %v584
    %v586 = vrot.slane %v585, 4
    %v587 = vadd.f32 %v585, %v586
    %v588 = vrot.slane %v587, 2
    %v589 = vadd.f32 %v587, %v588
    %v590 = vrot.slane %v589, 1
    %v591 = vadd.f32 %v589, %v590
    %v592 = vsel %vm36, %v548, 0.0
    %v593 = vsel %vm36, %v549, 0.0
    %v594 = vadd.f32 %v592, %v593
    %v595 = vrot.slane %v594, 4
    %v596 = vadd.f32 %v594, %v595
    %v597 = vrot.slane %v596, 2
    %v598 = vadd.f32 %v596, %v597
    %v599 = vrot.slane %v598, 1
    %v600 = vadd.f32 %v598, %v599
    %v601 = vsel %vm36, %v550, 0.0
    %v602 = vsel %vm36, %v551, 0.0
    %v603 = vadd.f32 %v601, %v602
    %v604 = vrot.slane %v603, 4
    %v605 = vadd.f32 %v603, %v604
    %v606 = vrot.slane %v605, 2
    %v607 = vadd.f32 %v605, %v606
    %v608 = vrot.slane %v607, 1
    %v609 = vadd.f32 %v607, %v608
    %v610 = vsel %vm36, %v552, 0.0
    %v611 = vsel %vm36, %v553, 0.0
    %v612 = vadd.f32 %v610, %v611
    %v613 = vrot.slane %v612, 4
    %v614 = vadd.f32 %v612, %v613
    %v615 = vrot.slane %v614, 2
    %v616 = vadd.f32 %v614, %v615
    %v617 = vrot.slane %v616, 1
    %v618 = vadd.f32 %v616, %v617
    %v619 = vsel %vm36, %v554, 0.0
    %v620 = vsel %vm36, %v555, 0.0
    %v621 = vadd.f32 %v619, %v620
    %v622 = vrot.slane %v621, 4
    %v623 = vadd.f32 %v621, %v622
    %v624 = vrot.slane %v623, 2
    %v625 = vadd.f32 %v623, %v624
    %v626 = vrot.slane %v625, 1
    %v627 = vadd.f32 %v625, %v626
    %v628 = vmul.f32 %v182, %v564
    %v629 = vmul.f32 %v183, %v573
    %v630 = vmul.f32 %v184, %v582
    %v631 = vmul.f32 %v185, %v591
    %v632 = vmul.f32 %v186, %v600
    %v633 = vmul.f32 %v187, %v609
    %v634 = vmul.f32 %v188, %v618
    %v635 = vmul.f32 %v189, %v627
    %v636 = vsel %vm36, %v628, 0.0
    %637 = vadd.xlane.f32.xlu0 %v636
    %v638 = vpop.xlane.xlu0 %637
    %v639 = vsel %vm36, %v629, 0.0
    %640 = vadd.xlane.f32.xlu0 %v639
    %v641 = vpop.xlane.xlu0 %640
    %v642 = vsel %vm36, %v630, 0.0
    %643 = vadd.xlane.f32.xlu0 %v642
    %v644 = vpop.xlane.xlu0 %643
    %v645 = vsel %vm36, %v631, 0.0
    %646 = vadd.xlane.f32.xlu0 %v645
    %v647 = vpop.xlane.xlu0 %646
    %v648 = vsel %vm36, %v632, 0.0
    %649 = vadd.xlane.f32.xlu0 %v648
    %v650 = vpop.xlane.xlu0 %649
    %v651 = vsel %vm36, %v633, 0.0
    %652 = vadd.xlane.f32.xlu0 %v651
    %v653 = vpop.xlane.xlu0 %652
    %v654 = vsel %vm36, %v634, 0.0
    %655 = vadd.xlane.f32.xlu0 %v654
    %v656 = vpop.xlane.xlu0 %655
    %v657 = vsel %vm36, %v635, 0.0
    %658 = vadd.xlane.f32.xlu0 %v657
    %v659 = vpop.xlane.xlu0 %658
    %v660 = vmul.f32 %v638, 0.17677669
    %v661 = vmul.f32 %v641, 0.17677669
    %v662 = vmul.f32 %v644, 0.17677669
    %v663 = vmul.f32 %v647, 0.17677669
    %v664 = vmul.f32 %v650, 0.17677669
    %v665 = vmul.f32 %v653, 0.17677669
    %v666 = vmul.f32 %v656, 0.17677669
    %v667 = vmul.f32 %v659, 0.17677669
    %v676 = vlaneseq
    %v677 = vand.u32 %v676, 127
    %v678 = vlaneseq
    %v679 = vshrl.u32 %v678, 7
    %v680 = vsub.s32 %v677, %v679
    %v681 = vrot.slane %v660, %v680
    %v682 = vlaneseq
    %v683 = vshrl.u32 %v682, 7
    %v684 = vsub.s32 %v677, %v683
    %v685 = vrot.slane %v661, %v684
    %v686 = vlaneseq
    %v687 = vshrl.u32 %v686, 7
    %v688 = vsub.s32 %v677, %v687
    %v689 = vrot.slane %v662, %v688
    %v690 = vlaneseq
    %v691 = vshrl.u32 %v690, 7
    %v692 = vsub.s32 %v677, %v691
    %v693 = vrot.slane %v663, %v692
    %v694 = vlaneseq
    %v695 = vshrl.u32 %v694, 7
    %v696 = vsub.s32 %v677, %v695
    %v697 = vrot.slane %v664, %v696
    %v698 = vlaneseq
    %v699 = vshrl.u32 %v698, 7
    %v700 = vsub.s32 %v677, %v699
    %v701 = vrot.slane %v665, %v700
    %v702 = vlaneseq
    %v703 = vshrl.u32 %v702, 7
    %v704 = vsub.s32 %v677, %v703
    %v705 = vrot.slane %v666, %v704
    %v706 = vlaneseq
    %v707 = vshrl.u32 %v706, 7
    %v708 = vsub.s32 %v677, %v707
    %v709 = vrot.slane %v667, %v708
    %vm710 = vcmask 1041409
    %v711 = vsel %vm710, %v685, %v681
    %vm712 = vcmask 1042434
    %v713 = vsel %vm712, %v689, %v711
    %vm714 = vcmask 1043459
    %v715 = vsel %vm714, %v693, %v713
    %vm716 = vcmask 1044484
    %v717 = vsel %vm716, %v697, %v715
    %vm718 = vcmask 1045509
    %v719 = vsel %vm718, %v701, %v717
    %vm720 = vcmask 1046534
    %v721 = vsel %vm720, %v705, %v719
    %vm722 = vcmask 1047559
    %v723 = vsel %vm722, %v709, %v721
    %725 = vxpose.xlu0.b32.start [1/16] %v723, 128
    %726 = vxpose.xlu0.b32.cont [2/16] 0.0, 128
    %727 = vxpose.xlu0.b32.cont [3/16] 0.0, 128
    %728 = vxpose.xlu0.b32.cont [4/16] 0.0, 128
    %729 = vxpose.xlu0.b32.cont [5/16] 0.0, 128
    %730 = vxpose.xlu0.b32.cont [6/16] 0.0, 128
    %731 = vxpose.xlu0.b32.cont [7/16] 0.0, 128
    %732 = vxpose.xlu0.b32.cont [8/16] 0.0, 128
    %733 = vxpose.xlu0.b32.cont [9/16] 0.0, 128
    %734 = vxpose.xlu0.b32.cont [10/16] 0.0, 128
    %735 = vxpose.xlu0.b32.cont [11/16] 0.0, 128
    %736 = vxpose.xlu0.b32.cont [12/16] 0.0, 128
    %737 = vxpose.xlu0.b32.cont [13/16] 0.0, 128
    %738 = vxpose.xlu0.b32.cont [14/16] 0.0, 128
    %739 = vxpose.xlu0.b32.cont [15/16] 0.0, 128
    %740 = vxpose.xlu0.b32.end [16/16] 0.0, 128
    %v741 = vpop.trf.xlu0
    %v742 = vpop.trf.xlu0
    %v743 = vpop.trf.xlu0
    %v744 = vpop.trf.xlu0
    %v745 = vpop.trf.xlu0
    %v746 = vpop.trf.xlu0
    %v747 = vpop.trf.xlu0
    %v748 = vpop.trf.xlu0
    %v749 = vpop.trf.xlu0
    %v750 = vpop.trf.xlu0
    %v751 = vpop.trf.xlu0
    %v752 = vpop.trf.xlu0
    %v753 = vpop.trf.xlu0
    %v754 = vpop.trf.xlu0
    %v755 = vpop.trf.xlu0
    %v756 = vpop.trf.xlu0
    %v757 = vld [vmem:[%s2] sm:$0xff]
    %vm758 = vcmp.eq.f32.partialorder %v757, 0.0
    %v759 = vsel %vm758, -1e+09, %v741
    %vm760 = vcmask 64512
    %v761 = vsel %vm760, %v759, -inf
    %v762 = vrot.slane %v761, 4
    %v763 = vmax.f32 %v761, %v762
    %v764 = vrot.slane %v763, 2
    %v765 = vmax.f32 %v763, %v764
    %v766 = vrot.slane %v765, 1
    %v767 = vmax.f32 %v765, %v766
    %v768 = vsub.f32 %v759, %v767
    %v769 = vmul.f32 %v768, 1.442695
    %v770 = vpow.pop %v769
    %v771 = vsel %vm760, %v770, 0.0
    %v772 = vrot.slane %v771, 4
    %v773 = vadd.f32 %v771, %v772
    %v774 = vrot.slane %v773, 2
    %v775 = vadd.f32 %v773, %v774
    %v776 = vrot.slane %v775, 1
    %v777 = vadd.f32 %v775, %v776
    %v778 = vrcp.pop %v777
    %v779 = vmul.f32 %v770, %v778
    %780 = vst.msk [vmem:[#allocation2] sm:$0xff] %vm760, %v779
    // Predicated region
    $region26: #{tpu_custom_call.1} parent=1 // pred_check
      _
    $region27: #{tpu_custom_call.1} parent=1 // pred_check_branch
      %782 = sbr.rel (0) target = $region29
    $region28: #{tpu_custom_call.1} parent=1 // pred_region
      %s784 = ssub.s32 128, 128
      %785 = vsyncadd [#allocation3], %s784
      %s787 = sshll.u32 [#allocation2], 4
      %s788 = int_to_ptr.vmem [resolvable:$true] %s787
      %790 = dma.vmem_to_hbm [thread:$0]  %s788, 128, %s6, [#allocation3]
    $region29: #{tpu_custom_call.1} parent=1 // pred_fallthru
      _
    // Predicated region
    $region30: #{tpu_custom_call.1} parent=1 // pred_check
      _
    $region31: #{tpu_custom_call.1} parent=1 // pred_check_branch
      %792 = sbr.rel (0) target = $region33
    $region32: #{tpu_custom_call.1} parent=1 // pred_region
      %793 = dma.done [#allocation3], 128
    $region33: #{tpu_custom_call.1} parent=1 // pred_fallthru
      _
    %794 = vsyncpa [#allocation3], 1

</llo_original>
